<compile_context>
chip_gen: v6e
topology: v6e:2x2x1
jax: 0.10.0
libtpu: 0.0.40
codegen_flags: <defaults>
</compile_context>

<pallas_src>
import functools

import jax
import jax.numpy as jnp
from jax.experimental import pallas as pl
from jax.experimental.pallas import tpu as pltpu


COEFF_BANK = {
    'gaussian': [2.368737348178644, 2.3218332060968687, 2.186620166400238,
                 1.9785357455909518, 1.7200563444604107, 1.4367118264767467,
                 1.1529882480025957, 0.8890134170352768, 0.6585973377702478,
                 0.4687700396753248, 0.3205737399288996, 0.2106319563365025,
                 0.13296850925636292, 0.08064947764026723, 0.04699834214974086,
                 0.026314295000921823],
    'sigmoid': [0.0, 0.006057306357564347, 0.019407599012746118,
                0.04848852855754725, 0.11024831053568876, 0.23462085565239668,
                0.4602813915432914, 0.8016437593070956, 1.1983562406929047,
                1.539718608456709, 1.7653791443476032, 1.889751689464311,
                1.9515114714424528, 1.9805924009872535, 1.9939426936424351, 2.0],
    'laplacian': [3.0235547043507864, 2.475477220065594, 2.0267493286116927,
                  1.6593620041145454, 1.3585707032576908, 1.112303614987853,
                  0.910677176350366, 0.7455994104042655, 0.6104451667747834,
                  0.49979023110633275, 0.40919363229470634, 0.3350194107233597,
                  0.274290694437278, 0.22457022681891523, 0.18386255092234366,
                  0.15053392477948924],
    'cum_exponential': [0.24858106424723717, 0.45210202617930384,
                        0.6187308966091, 0.7551550771806206, 0.8668497492779882,
                        0.9582976122790642, 1.0331687900213073,
                        1.0944681257580495, 1.1446557770689725,
                        1.1857459506219796, 1.219387739359138,
                        1.246931306386802, 1.2694820717618154,
                        1.2879450768797849, 1.3030613069641026,
                        1.3154374294047362],
    'vanilla': [1.0] * 16,
}


def _make_reg_coeff(freq_div_mode='vanilla'):
    assert freq_div_mode in COEFF_BANK, f'Invalid freq_div_mode : {freq_div_mode}'
    c = jnp.asarray(COEFF_BANK[freq_div_mode], dtype=jnp.float32)
    if freq_div_mode != 'vanilla':
        c = c / jnp.max(c) * 1.3
    return c


def _quat_to_mat_entries(r, i, j, k):
    """9 rotation-matrix entries as (K, TILE_T) planes (row-major), matching
    pytorch3d quaternion_to_matrix with wxyz quaternions."""
    two_s = 2.0 / (r * r + i * i + j * j + k * k)
    return (
        (1.0 - two_s * (j * j + k * k), two_s * (i * j - k * r), two_s * (i * k + j * r)),
        (two_s * (i * j + k * r), 1.0 - two_s * (i * i + k * k), two_s * (j * k - i * r)),
        (two_s * (i * k - j * r), two_s * (j * k + i * r), 1.0 - two_s * (i * i + j * j)),
    )


def _motion_reg_kernel(motion_ref, coeff_ref, out_ref,
                       acc_t_ref, acc_r_ref, carry_ref, *,
                       total_t, tile_t, n_bases,
                       n_transl, n_rot, use_transl, use_rot):
    # motion_ref: (7, K, TILE_T) f32 VMEM block (time on lanes)
    # coeff_ref : (K, 1) f32 VMEM (resident)
    # out_ref   : (1, 1) f32 SMEM scalar loss
    # acc_*_ref : (K, 1) f32 VMEM per-basis partial sums (persist across grid)
    # carry_ref : (12, n_levels, K, 1) f32 VMEM carried boundary columns
    i = pl.program_id(0)

    @pl.when(i == 0)
    def _init():
        acc_t_ref[...] = jnp.zeros_like(acc_t_ref)
        acc_r_ref[...] = jnp.zeros_like(acc_r_ref)
        carry_ref[...] = jnp.zeros_like(carry_ref)

    lane = jax.lax.broadcasted_iota(jnp.int32, (n_bases, tile_t), 1)
    gt = lane + i * tile_t          # global time index of each lane
    is_lane0 = lane == 0

    def backward_diffs(plane, plane_idx, n):
        """Apply the backward first-difference n times along lanes.

        Lane 0 of each level is stitched with the carried last column of the
        previous tile; positions with gt < n (incl. tile-0 boundary) and the
        ragged-tile padding are masked out by the caller before the sqrt.
        """
        d = plane
        for lvl in range(n):
            carry_col = carry_ref[plane_idx, lvl]                  # (K, 1)
            carry_ref[plane_idx, lvl] = d[:, tile_t - 1:tile_t]    # for next tile
            prev = jnp.where(is_lane0, carry_col, pltpu.roll(d, 1, axis=1))
            d = d - prev
        return d

    # ---- translation branch -------------------------------------------------
    if use_transl:
        dtx = backward_diffs(motion_ref[0], 0, n_transl)
        dty = backward_diffs(motion_ref[1], 1, n_transl)
        dtz = backward_diffs(motion_ref[2], 2, n_transl)
        ssq = dtx * dtx + dty * dty + dtz * dtz                    # (K, TILE_T)
        valid = (gt >= n_transl) & (gt <= total_t - 1)
        tnorm = jnp.sqrt(jnp.where(valid, ssq, 0.0))
        acc_t_ref[...] += jnp.sum(tnorm, axis=1, keepdims=True)    # lane reduce

    # ---- rotation branch ----------------------------------------------------
    if use_rot:
        m = _quat_to_mat_entries(motion_ref[3], motion_ref[4],
                                 motion_ref[5], motion_ref[6])
        fro = None
        plane_idx = 3
        for p in range(3):
            for q in range(3):
                d = backward_diffs(m[p][q], plane_idx, n_rot)
                plane_idx += 1
                eye = 1.0 if p == q else 0.0
                term = (eye - d) * (eye - d)
                fro = term if fro is None else fro + term
        valid = (gt >= n_rot) & (gt <= total_t - 1)
        rnorm = jnp.sqrt(jnp.where(valid, fro, 0.0))
        acc_r_ref[...] += jnp.sum(rnorm, axis=1, keepdims=True)

    # ---- finalize: coeff applied once to 16 per-basis sums ------------------
    @pl.when(i == pl.num_programs(0) - 1)
    def _finalize():
        coeff = coeff_ref[...]                                     # (K, 1)
        total = jnp.float32(0.0)
        if use_transl:
            total = total + jnp.sum(acc_t_ref[...] * coeff) / float(
                (total_t - n_transl) * n_bases)
        if use_rot:
            total = total + jnp.sum(acc_r_ref[...] * coeff) / float(
                (total_t - n_rot) * n_bases)
        out_ref[0, 0] = total


def motion_basis_regularization(motion_table, *, transl_degree=0, rot_degree=0,
                                freq_div_mode='vanilla', tile_t=None,
                                motion_is_channel_first=False):
    """motion_table: (T, K=16, 7) float32 (or (7, K, T) if channel-first).
    Returns the scalar regularization loss (float32)."""
    if motion_is_channel_first:
        motion_cf = motion_table.astype(jnp.float32)               # (7, K, T)
    else:
        # TODO(synk): have the producer emit the table channel-first (7, K, T)
        # so this transpose (one extra full HBM round trip) disappears.
        motion_cf = jnp.transpose(motion_table.astype(jnp.float32), (2, 1, 0))
    C, K, T = motion_cf.shape
    assert C == 7 and K == 16, (C, K)

    use_transl = transl_degree >= 0
    use_rot = rot_degree >= 0
    n_transl = transl_degree + 1 if use_transl else 0
    n_rot = rot_degree + 1 if use_rot else 0
    if use_transl:
        assert T > n_transl, 'need more timesteps than transl diff order'
    if use_rot:
        assert T > n_rot, 'need more timesteps than rot diff order'

    if tile_t is None:
        tile_t = min(1024, pl.cdiv(T, 128) * 128)   # lane-aligned, VMEM-safe on v5e/v6e/v7x
    assert tile_t % 128 == 0, 'tile_t must be a multiple of 128 lanes'
    grid = (pl.cdiv(T, tile_t),)

    coeff = _make_reg_coeff(freq_div_mode).reshape(K, 1)
    n_levels = max(n_transl, n_rot, 1)

    kernel = functools.partial(
        _motion_reg_kernel,
        total_t=T, tile_t=tile_t, n_bases=K,
        n_transl=n_transl, n_rot=n_rot,
        use_transl=use_transl, use_rot=use_rot)

    out = pl.pallas_call(
        kernel,
        out_shape=jax.ShapeDtypeStruct((1, 1), jnp.float32),
        grid_spec=pltpu.PrefetchScalarGridSpec(
            num_scalar_prefetch=0,
            grid=grid,
            in_specs=[
                pl.BlockSpec((7, K, tile_t), lambda i: (0, 0, i)),   # motion tile
                pl.BlockSpec((K, 1), lambda i: (0, 0)),              # coeff (resident)
            ],
            out_specs=pl.BlockSpec(memory_space=pltpu.MemorySpace.SMEM),
            scratch_shapes=[
                pltpu.VMEM((K, 1), jnp.float32),                  # transl per-basis sums
                pltpu.VMEM((K, 1), jnp.float32),                  # rot per-basis sums
                pltpu.VMEM((12, n_levels, K, 1), jnp.float32),    # carried boundary cols
            ]),
        compiler_params=pltpu.CompilerParams(
            # The carried boundary columns + partial sums make the T axis a
            # sequential reduction -> "arbitrary".
            # TODO(synk): on v7x a 2-way "parallel" split of T (per-core partial
            # sums + one boundary fix-up) could use both TensorCores.
            dimension_semantics=("arbitrary",),
            vmem_limit_bytes=32 * 1024 * 1024),
    )(motion_cf, coeff)
    return out[0, 0]


def _reference(motion_table, *, transl_degree=0, rot_degree=0, freq_div_mode='vanilla'):
    """Pure-JAX re-statement of the PyTorch forward, for verification."""
    coeff = _make_reg_coeff(freq_div_mode)
    transl = motion_table[..., :3].astype(jnp.float32)
    quat = motion_table[..., 3:].astype(jnp.float32)
    r, i, j, k = quat[..., 0], quat[..., 1], quat[..., 2], quat[..., 3]
    two_s = 2.0 / jnp.sum(quat * quat, axis=-1)
    rot = jnp.stack([
        1 - two_s * (j * j + k * k), two_s * (i * j - k * r), two_s * (i * k + j * r),
        two_s * (i * j + k * r), 1 - two_s * (i * i + k * k), two_s * (j * k - i * r),
        two_s * (i * k - j * r), two_s * (j * k + i * r), 1 - two_s * (i * i + j * j),
    ], axis=-1).reshape(*motion_table.shape[:-1], 3, 3)

    def diff_n(x, n):
        for _ in range(n):
            x = x[1:] - x[:-1]
        return x

    out = jnp.float32(0.0)
    if transl_degree >= 0:
        transl_d = diff_n(transl, transl_degree + 1)
        out = out + jnp.mean(jnp.linalg.norm(transl_d, axis=-1) * coeff[None])
    if rot_degree >= 0:
        rot_d = diff_n(rot, rot_degree + 1)
        out = out + jnp.mean(
            jnp.sqrt(jnp.sum((jnp.eye(3)[None, None] - rot_d) ** 2, axis=(-1, -2)))
            * coeff[None])
    return out


if __name__ == "__main__":
    key = jax.random.PRNGKey(0)
    k1, k2 = jax.random.split(key)
    K = 16  # fixed by reg_coeff

    # Case 1: tiny sequence, single (padded) tile.
    T1 = 8
    motion1 = jax.random.normal(k1, (T1, K, 7), dtype=jnp.float32)
    loss1 = jax.block_until_ready(motion_basis_regularization(motion1))
    ref1 = _reference(motion1)
    assert jnp.allclose(loss1, ref1, rtol=1e-4, atol=1e-5), (float(loss1), float(ref1))

    # Case 2: multi-tile path with a ragged last tile — exercises the carried
    # boundary columns and the masked padding.
    T2 = 300
    motion2 = jax.random.normal(k2, (T2, K, 7), dtype=jnp.float32)
    loss2 = jax.block_until_ready(motion_basis_regularization(motion2, tile_t=128))
    ref2 = _reference(motion2)
    assert jnp.allclose(loss2, ref2, rtol=1e-4, atol=1e-5), (float(loss2), float(ref2))

    print("KERNEL_OK")
</pallas_src>

<mosaic_0001>
module attributes {stable_mosaic.version = 11 : i64} {
  func.func @_motion_reg_kernel(%arg0: i32, %arg1: memref<7x16x128xf32, #tpu.memory_space<vmem>>, %arg2: memref<16x1xf32, #tpu.memory_space<vmem>>, %arg3: memref<1x1xf32, #tpu.memory_space<smem>>, %arg4: memref<16x1xf32, #tpu.memory_space<vmem>>, %arg5: memref<16x1xf32, #tpu.memory_space<vmem>>, %arg6: memref<12x1x16x1xf32, #tpu.memory_space<vmem>>) attributes {dimension_semantics = [#tpu.dimension_semantics<arbitrary>], iteration_bounds = array<i64: 1>, scalar_prefetch = 0 : i64, scratch_operands = 3 : i64, tpu.core_type = #tpu.core_type<tc>, window_params = [{transform_indices = @transform_0, window_bounds = array<i64: 7, 16, 128>}, {pipeline_mode = #tpu.pipeline_mode<synchronous>, transform_indices = @transform_1, window_bounds = array<i64: 16, 1>}, {transform_indices = @transform_2, window_bounds = array<i64: 1, 1>}]} {
    %c0_i32 = arith.constant 0 : i32
    %0 = arith.cmpi eq, %arg0, %c0_i32 : i32
    %1 = arith.extui %0 : i1 to i32
    %c0_i32_0 = arith.constant 0 : i32
    %2 = arith.cmpi ne, %1, %c0_i32_0 : i32
    scf.if %2 {
      %cst_156 = arith.constant 0.000000e+00 : f32
      %293 = vector.broadcast %cst_156 : f32 to vector<16x1xf32>
      %c0_157 = arith.constant 0 : index
      %c0_158 = arith.constant 0 : index
      %294 = vector.load %arg4[%c0_157, %c0_158] : memref<16x1xf32, #tpu.memory_space<vmem>>, vector<16x1xf32>
      tpu.vector_store %arg4[%c0_157, %c0_158], %293 {strides = array<i32>} : memref<16x1xf32, #tpu.memory_space<vmem>>, vector<16x1xf32>,
      %cst_159 = arith.constant 0.000000e+00 : f32
      %295 = vector.broadcast %cst_159 : f32 to vector<16x1xf32>
      %c0_160 = arith.constant 0 : index
      %c0_161 = arith.constant 0 : index
      %296 = vector.load %arg5[%c0_160, %c0_161] : memref<16x1xf32, #tpu.memory_space<vmem>>, vector<16x1xf32>
      tpu.vector_store %arg5[%c0_160, %c0_161], %295 {strides = array<i32>} : memref<16x1xf32, #tpu.memory_space<vmem>>, vector<16x1xf32>,
      %cst_162 = arith.constant 0.000000e+00 : f32
      %297 = vector.broadcast %cst_162 : f32 to vector<12x1x16x1xf32>
      %c0_163 = arith.constant 0 : index
      %c0_164 = arith.constant 0 : index
      %c0_165 = arith.constant 0 : index
      %c0_166 = arith.constant 0 : index
      %298 = vector.load %arg6[%c0_163, %c0_164, %c0_165, %c0_166] : memref<12x1x16x1xf32, #tpu.memory_space<vmem>>, vector<12x1x16x1xf32>
      tpu.vector_store %arg6[%c0_163, %c0_164, %c0_165, %c0_166], %297 {strides = array<i32>} : memref<12x1x16x1xf32, #tpu.memory_space<vmem>>, vector<12x1x16x1xf32>,
    } else {
    }
    %3 = tpu.iota {dimensions = array<i32: 1>} : vector<16x128xi32>
    %c128_i32 = arith.constant 128 : i32
    %4 = arith.muli %arg0, %c128_i32 : i32
    %5 = vector.broadcast %4 : i32 to vector<16x128xi32>
    %6 = arith.addi %3, %5 : vector<16x128xi32>
    %c0_i32_1 = arith.constant 0 : i32
    %7 = vector.broadcast %c0_i32_1 : i32 to vector<16x128xi32>
    %8 = arith.cmpi eq, %3, %7 : vector<16x128xi32>
    %c0 = arith.constant 0 : index
    %c0_2 = arith.constant 0 : index
    %c0_3 = arith.constant 0 : index
    %9 = vector.load %arg1[%c0, %c0_2, %c0_3] : memref<7x16x128xf32, #tpu.memory_space<vmem>>, vector<1x16x128xf32>
    %10 = vector.shape_cast %9 : vector<1x16x128xf32> to vector<16x128xf32>
    %c0_4 = arith.constant 0 : index
    %c0_5 = arith.constant 0 : index
    %c0_6 = arith.constant 0 : index
    %c0_7 = arith.constant 0 : index
    %11 = vector.load %arg6[%c0_4, %c0_5, %c0_6, %c0_7] : memref<12x1x16x1xf32, #tpu.memory_space<vmem>>, vector<1x1x16x1xf32>
    %12 = vector.shape_cast %11 : vector<1x1x16x1xf32> to vector<16x1xf32>
    %13 = vector.extract_strided_slice %10 {offsets = [0, 127], sizes = [16, 1], strides = [1, 1]} : vector<16x128xf32> to vector<16x1xf32>
    %c0_8 = arith.constant 0 : index
    %c0_9 = arith.constant 0 : index
    %c0_10 = arith.constant 0 : index
    %c0_11 = arith.constant 0 : index
    %14 = vector.load %arg6[%c0_8, %c0_9, %c0_10, %c0_11] : memref<12x1x16x1xf32, #tpu.memory_space<vmem>>, vector<1x1x16x1xf32>
    %15 = vector.shape_cast %14 : vector<1x1x16x1xf32> to vector<16x1xf32>
    %16 = vector.shape_cast %13 : vector<16x1xf32> to vector<1x1x16x1xf32>
    tpu.vector_store %arg6[%c0_8, %c0_9, %c0_10, %c0_11], %16 {strides = array<i32>} : memref<12x1x16x1xf32, #tpu.memory_space<vmem>>, vector<1x1x16x1xf32>,
    %c1_i32 = arith.constant 1 : i32
    %17 = tpu.dynamic_rotate %10 by %c1_i32 dim 1 : vector<16x128xf32>, i32 -> vector<16x128xf32>
    %18 = vector.shape_cast %12 : vector<16x1xf32> to vector<16x1xf32>
    %19 = vector.broadcast %18 : vector<16x1xf32> to vector<16x128xf32>
    %20 = arith.select %8, %19, %17 : vector<16x128xi1>, vector<16x128xf32>
    %21 = arith.subf %10, %20 : vector<16x128xf32>
    %c1 = arith.constant 1 : index
    %c0_12 = arith.constant 0 : index
    %c0_13 = arith.constant 0 : index
    %22 = vector.load %arg1[%c1, %c0_12, %c0_13] : memref<7x16x128xf32, #tpu.memory_space<vmem>>, vector<1x16x128xf32>
    %23 = vector.shape_cast %22 : vector<1x16x128xf32> to vector<16x128xf32>
    %c1_14 = arith.constant 1 : index
    %c0_15 = arith.constant 0 : index
    %c0_16 = arith.constant 0 : index
    %c0_17 = arith.constant 0 : index
    %24 = vector.load %arg6[%c1_14, %c0_15, %c0_16, %c0_17] : memref<12x1x16x1xf32, #tpu.memory_space<vmem>>, vector<1x1x16x1xf32>
    %25 = vector.shape_cast %24 : vector<1x1x16x1xf32> to vector<16x1xf32>
    %26 = vector.extract_strided_slice %23 {offsets = [0, 127], sizes = [16, 1], strides = [1, 1]} : vector<16x128xf32> to vector<16x1xf32>
    %c1_18 = arith.constant 1 : index
    %c0_19 = arith.constant 0 : index
    %c0_20 = arith.constant 0 : index
    %c0_21 = arith.constant 0 : index
    %27 = vector.load %arg6[%c1_18, %c0_19, %c0_20, %c0_21] : memref<12x1x16x1xf32, #tpu.memory_space<vmem>>, vector<1x1x16x1xf32>
    %28 = vector.shape_cast %27 : vector<1x1x16x1xf32> to vector<16x1xf32>
    %29 = vector.shape_cast %26 : vector<16x1xf32> to vector<1x1x16x1xf32>
    tpu.vector_store %arg6[%c1_18, %c0_19, %c0_20, %c0_21], %29 {strides = array<i32>} : memref<12x1x16x1xf32, #tpu.memory_space<vmem>>, vector<1x1x16x1xf32>,
    %c1_i32_22 = arith.constant 1 : i32
    %30 = tpu.dynamic_rotate %23 by %c1_i32_22 dim 1 : vector<16x128xf32>, i32 -> vector<16x128xf32>
    %31 = vector.shape_cast %25 : vector<16x1xf32> to vector<16x1xf32>
    %32 = vector.broadcast %31 : vector<16x1xf32> to vector<16x128xf32>
    %33 = arith.select %8, %32, %30 : vector<16x128xi1>, vector<16x128xf32>
    %34 = arith.subf %23, %33 : vector<16x128xf32>
    %c2 = arith.constant 2 : index
    %c0_23 = arith.constant 0 : index
    %c0_24 = arith.constant 0 : index
    %35 = vector.load %arg1[%c2, %c0_23, %c0_24] : memref<7x16x128xf32, #tpu.memory_space<vmem>>, vector<1x16x128xf32>
    %36 = vector.shape_cast %35 : vector<1x16x128xf32> to vector<16x128xf32>
    %c2_25 = arith.constant 2 : index
    %c0_26 = arith.constant 0 : index
    %c0_27 = arith.constant 0 : index
    %c0_28 = arith.constant 0 : index
    %37 = vector.load %arg6[%c2_25, %c0_26, %c0_27, %c0_28] : memref<12x1x16x1xf32, #tpu.memory_space<vmem>>, vector<1x1x16x1xf32>
    %38 = vector.shape_cast %37 : vector<1x1x16x1xf32> to vector<16x1xf32>
    %39 = vector.extract_strided_slice %36 {offsets = [0, 127], sizes = [16, 1], strides = [1, 1]} : vector<16x128xf32> to vector<16x1xf32>
    %c2_29 = arith.constant 2 : index
    %c0_30 = arith.constant 0 : index
    %c0_31 = arith.constant 0 : index
    %c0_32 = arith.constant 0 : index
    %40 = vector.load %arg6[%c2_29, %c0_30, %c0_31, %c0_32] : memref<12x1x16x1xf32, #tpu.memory_space<vmem>>, vector<1x1x16x1xf32>
    %41 = vector.shape_cast %40 : vector<1x1x16x1xf32> to vector<16x1xf32>
    %42 = vector.shape_cast %39 : vector<16x1xf32> to vector<1x1x16x1xf32>
    tpu.vector_store %arg6[%c2_29, %c0_30, %c0_31, %c0_32], %42 {strides = array<i32>} : memref<12x1x16x1xf32, #tpu.memory_space<vmem>>, vector<1x1x16x1xf32>,
    %c1_i32_33 = arith.constant 1 : i32
    %43 = tpu.dynamic_rotate %36 by %c1_i32_33 dim 1 : vector<16x128xf32>, i32 -> vector<16x128xf32>
    %44 = vector.shape_cast %38 : vector<16x1xf32> to vector<16x1xf32>
    %45 = vector.broadcast %44 : vector<16x1xf32> to vector<16x128xf32>
    %46 = arith.select %8, %45, %43 : vector<16x128xi1>, vector<16x128xf32>
    %47 = arith.subf %36, %46 : vector<16x128xf32>
    %48 = arith.mulf %21, %21 : vector<16x128xf32>
    %49 = arith.mulf %34, %34 : vector<16x128xf32>
    %50 = arith.addf %48, %49 : vector<16x128xf32>
    %51 = arith.mulf %47, %47 : vector<16x128xf32>
    %52 = arith.addf %50, %51 : vector<16x128xf32>
    %c1_i32_34 = arith.constant 1 : i32
    %53 = vector.broadcast %c1_i32_34 : i32 to vector<16x128xi32>
    %54 = arith.cmpi sge, %6, %53 : vector<16x128xi32>
    %c7_i32 = arith.constant 7 : i32
    %55 = vector.broadcast %c7_i32 : i32 to vector<16x128xi32>
    %56 = arith.cmpi sle, %6, %55 : vector<16x128xi32>
    %57 = arith.andi %54, %56 : vector<16x128xi1>
    %cst = arith.constant 0.000000e+00 : f32
    %58 = vector.broadcast %cst : f32 to vector<16x128xf32>
    %59 = arith.select %57, %52, %58 : vector<16x128xi1>, vector<16x128xf32>
    %60 = math.sqrt %59 : vector<16x128xf32>
    %c0_35 = arith.constant 0 : index
    %c0_36 = arith.constant 0 : index
    %61 = vector.load %arg4[%c0_35, %c0_36] : memref<16x1xf32, #tpu.memory_space<vmem>>, vector<16x1xf32>
    %cst_37 = arith.constant dense<0.000000e+00> : vector<16xf32>
    %62 = vector.multi_reduction <add>, %60, %cst_37 [1] : vector<16x128xf32> to vector<16xf32>
    %63 = vector.shape_cast %62 : vector<16xf32> to vector<16x1xf32>
    %64 = arith.addf %61, %63 : vector<16x1xf32>
    %c0_38 = arith.constant 0 : index
    %c0_39 = arith.constant 0 : index
    %65 = vector.load %arg4[%c0_38, %c0_39] : memref<16x1xf32, #tpu.memory_space<vmem>>, vector<16x1xf32>
    tpu.vector_store %arg4[%c0_38, %c0_39], %64 {strides = array<i32>} : memref<16x1xf32, #tpu.memory_space<vmem>>, vector<16x1xf32>,
    %c3 = arith.constant 3 : index
    %c0_40 = arith.constant 0 : index
    %c0_41 = arith.constant 0 : index
    %66 = vector.load %arg1[%c3, %c0_40, %c0_41] : memref<7x16x128xf32, #tpu.memory_space<vmem>>, vector<1x16x128xf32>
    %67 = vector.shape_cast %66 : vector<1x16x128xf32> to vector<16x128xf32>
    %c4 = arith.constant 4 : index
    %c0_42 = arith.constant 0 : index
    %c0_43 = arith.constant 0 : index
    %68 = vector.load %arg1[%c4, %c0_42, %c0_43] : memref<7x16x128xf32, #tpu.memory_space<vmem>>, vector<1x16x128xf32>
    %69 = vector.shape_cast %68 : vector<1x16x128xf32> to vector<16x128xf32>
    %c5 = arith.constant 5 : index
    %c0_44 = arith.constant 0 : index
    %c0_45 = arith.constant 0 : index
    %70 = vector.load %arg1[%c5, %c0_44, %c0_45] : memref<7x16x128xf32, #tpu.memory_space<vmem>>, vector<1x16x128xf32>
    %71 = vector.shape_cast %70 : vector<1x16x128xf32> to vector<16x128xf32>
    %c6 = arith.constant 6 : index
    %c0_46 = arith.constant 0 : index
    %c0_47 = arith.constant 0 : index
    %72 = vector.load %arg1[%c6, %c0_46, %c0_47] : memref<7x16x128xf32, #tpu.memory_space<vmem>>, vector<1x16x128xf32>
    %73 = vector.shape_cast %72 : vector<1x16x128xf32> to vector<16x128xf32>
    %74 = arith.mulf %67, %67 : vector<16x128xf32>
    %75 = arith.mulf %69, %69 : vector<16x128xf32>
    %76 = arith.addf %74, %75 : vector<16x128xf32>
    %77 = arith.mulf %71, %71 : vector<16x128xf32>
    %78 = arith.addf %76, %77 : vector<16x128xf32>
    %79 = arith.mulf %73, %73 : vector<16x128xf32>
    %80 = arith.addf %78, %79 : vector<16x128xf32>
    %cst_48 = arith.constant 2.000000e+00 : f32
    %81 = vector.broadcast %cst_48 : f32 to vector<16x128xf32>
    %82 = arith.divf %81, %80 : vector<16x128xf32>
    %83 = arith.mulf %71, %71 : vector<16x128xf32>
    %84 = arith.mulf %73, %73 : vector<16x128xf32>
    %85 = arith.addf %83, %84 : vector<16x128xf32>
    %86 = arith.mulf %82, %85 : vector<16x128xf32>
    %cst_49 = arith.constant 1.000000e+00 : f32
    %87 = vector.broadcast %cst_49 : f32 to vector<16x128xf32>
    %88 = arith.subf %87, %86 : vector<16x128xf32>
    %89 = arith.mulf %69, %71 : vector<16x128xf32>
    %90 = arith.mulf %73, %67 : vector<16x128xf32>
    %91 = arith.subf %89, %90 : vector<16x128xf32>
    %92 = arith.mulf %82, %91 : vector<16x128xf32>
    %93 = arith.mulf %69, %73 : vector<16x128xf32>
    %94 = arith.mulf %71, %67 : vector<16x128xf32>
    %95 = arith.addf %93, %94 : vector<16x128xf32>
    %96 = arith.mulf %82, %95 : vector<16x128xf32>
    %97 = arith.mulf %69, %71 : vector<16x128xf32>
    %98 = arith.mulf %73, %67 : vector<16x128xf32>
    %99 = arith.addf %97, %98 : vector<16x128xf32>
    %100 = arith.mulf %82, %99 : vector<16x128xf32>
    %101 = arith.mulf %69, %69 : vector<16x128xf32>
    %102 = arith.mulf %73, %73 : vector<16x128xf32>
    %103 = arith.addf %101, %102 : vector<16x128xf32>
    %104 = arith.mulf %82, %103 : vector<16x128xf32>
    %cst_50 = arith.constant 1.000000e+00 : f32
    %105 = vector.broadcast %cst_50 : f32 to vector<16x128xf32>
    %106 = arith.subf %105, %104 : vector<16x128xf32>
    %107 = arith.mulf %71, %73 : vector<16x128xf32>
    %108 = arith.mulf %69, %67 : vector<16x128xf32>
    %109 = arith.subf %107, %108 : vector<16x128xf32>
    %110 = arith.mulf %82, %109 : vector<16x128xf32>
    %111 = arith.mulf %69, %73 : vector<16x128xf32>
    %112 = arith.mulf %71, %67 : vector<16x128xf32>
    %113 = arith.subf %111, %112 : vector<16x128xf32>
    %114 = arith.mulf %82, %113 : vector<16x128xf32>
    %115 = arith.mulf %71, %73 : vector<16x128xf32>
    %116 = arith.mulf %69, %67 : vector<16x128xf32>
    %117 = arith.addf %115, %116 : vector<16x128xf32>
    %118 = arith.mulf %82, %117 : vector<16x128xf32>
    %119 = arith.mulf %69, %69 : vector<16x128xf32>
    %120 = arith.mulf %71, %71 : vector<16x128xf32>
    %121 = arith.addf %119, %120 : vector<16x128xf32>
    %122 = arith.mulf %82, %121 : vector<16x128xf32>
    %cst_51 = arith.constant 1.000000e+00 : f32
    %123 = vector.broadcast %cst_51 : f32 to vector<16x128xf32>
    %124 = arith.subf %123, %122 : vector<16x128xf32>
    %c3_52 = arith.constant 3 : index
    %c0_53 = arith.constant 0 : index
    %c0_54 = arith.constant 0 : index
    %c0_55 = arith.constant 0 : index
    %125 = vector.load %arg6[%c3_52, %c0_53, %c0_54, %c0_55] : memref<12x1x16x1xf32, #tpu.memory_space<vmem>>, vector<1x1x16x1xf32>
    %126 = vector.shape_cast %125 : vector<1x1x16x1xf32> to vector<16x1xf32>
    %127 = vector.extract_strided_slice %88 {offsets = [0, 127], sizes = [16, 1], strides = [1, 1]} : vector<16x128xf32> to vector<16x1xf32>
    %c3_56 = arith.constant 3 : index
    %c0_57 = arith.constant 0 : index
    %c0_58 = arith.constant 0 : index
    %c0_59 = arith.constant 0 : index
    %128 = vector.load %arg6[%c3_56, %c0_57, %c0_58, %c0_59] : memref<12x1x16x1xf32, #tpu.memory_space<vmem>>, vector<1x1x16x1xf32>
    %129 = vector.shape_cast %128 : vector<1x1x16x1xf32> to vector<16x1xf32>
    %130 = vector.shape_cast %127 : vector<16x1xf32> to vector<1x1x16x1xf32>
    tpu.vector_store %arg6[%c3_56, %c0_57, %c0_58, %c0_59], %130 {strides = array<i32>} : memref<12x1x16x1xf32, #tpu.memory_space<vmem>>, vector<1x1x16x1xf32>,
    %c1_i32_60 = arith.constant 1 : i32
    %131 = tpu.dynamic_rotate %88 by %c1_i32_60 dim 1 : vector<16x128xf32>, i32 -> vector<16x128xf32>
    %132 = vector.shape_cast %126 : vector<16x1xf32> to vector<16x1xf32>
    %133 = vector.broadcast %132 : vector<16x1xf32> to vector<16x128xf32>
    %134 = arith.select %8, %133, %131 : vector<16x128xi1>, vector<16x128xf32>
    %135 = arith.subf %88, %134 : vector<16x128xf32>
    %cst_61 = arith.constant 1.000000e+00 : f32
    %136 = vector.broadcast %cst_61 : f32 to vector<16x128xf32>
    %137 = arith.subf %136, %135 : vector<16x128xf32>
    %cst_62 = arith.constant 1.000000e+00 : f32
    %138 = vector.broadcast %cst_62 : f32 to vector<16x128xf32>
    %139 = arith.subf %138, %135 : vector<16x128xf32>
    %140 = arith.mulf %137, %139 : vector<16x128xf32>
    %c4_63 = arith.constant 4 : index
    %c0_64 = arith.constant 0 : index
    %c0_65 = arith.constant 0 : index
    %c0_66 = arith.constant 0 : index
    %141 = vector.load %arg6[%c4_63, %c0_64, %c0_65, %c0_66] : memref<12x1x16x1xf32, #tpu.memory_space<vmem>>, vector<1x1x16x1xf32>
    %142 = vector.shape_cast %141 : vector<1x1x16x1xf32> to vector<16x1xf32>
    %143 = vector.extract_strided_slice %92 {offsets = [0, 127], sizes = [16, 1], strides = [1, 1]} : vector<16x128xf32> to vector<16x1xf32>
    %c4_67 = arith.constant 4 : index
    %c0_68 = arith.constant 0 : index
    %c0_69 = arith.constant 0 : index
    %c0_70 = arith.constant 0 : index
    %144 = vector.load %arg6[%c4_67, %c0_68, %c0_69, %c0_70] : memref<12x1x16x1xf32, #tpu.memory_space<vmem>>, vector<1x1x16x1xf32>
    %145 = vector.shape_cast %144 : vector<1x1x16x1xf32> to vector<16x1xf32>
    %146 = vector.shape_cast %143 : vector<16x1xf32> to vector<1x1x16x1xf32>
    tpu.vector_store %arg6[%c4_67, %c0_68, %c0_69, %c0_70], %146 {strides = array<i32>} : memref<12x1x16x1xf32, #tpu.memory_space<vmem>>, vector<1x1x16x1xf32>,
    %c1_i32_71 = arith.constant 1 : i32
    %147 = tpu.dynamic_rotate %92 by %c1_i32_71 dim 1 : vector<16x128xf32>, i32 -> vector<16x128xf32>
    %148 = vector.shape_cast %142 : vector<16x1xf32> to vector<16x1xf32>
    %149 = vector.broadcast %148 : vector<16x1xf32> to vector<16x128xf32>
    %150 = arith.select %8, %149, %147 : vector<16x128xi1>, vector<16x128xf32>
    %151 = arith.subf %92, %150 : vector<16x128xf32>
    %cst_72 = arith.constant 0.000000e+00 : f32
    %152 = vector.broadcast %cst_72 : f32 to vector<16x128xf32>
    %153 = arith.subf %152, %151 : vector<16x128xf32>
    %cst_73 = arith.constant 0.000000e+00 : f32
    %154 = vector.broadcast %cst_73 : f32 to vector<16x128xf32>
    %155 = arith.subf %154, %151 : vector<16x128xf32>
    %156 = arith.mulf %153, %155 : vector<16x128xf32>
    %157 = arith.addf %140, %156 : vector<16x128xf32>
    %c5_74 = arith.constant 5 : index
    %c0_75 = arith.constant 0 : index
    %c0_76 = arith.constant 0 : index
    %c0_77 = arith.constant 0 : index
    %158 = vector.load %arg6[%c5_74, %c0_75, %c0_76, %c0_77] : memref<12x1x16x1xf32, #tpu.memory_space<vmem>>, vector<1x1x16x1xf32>
    %159 = vector.shape_cast %158 : vector<1x1x16x1xf32> to vector<16x1xf32>
    %160 = vector.extract_strided_slice %96 {offsets = [0, 127], sizes = [16, 1], strides = [1, 1]} : vector<16x128xf32> to vector<16x1xf32>
    %c5_78 = arith.constant 5 : index
    %c0_79 = arith.constant 0 : index
    %c0_80 = arith.constant 0 : index
    %c0_81 = arith.constant 0 : index
    %161 = vector.load %arg6[%c5_78, %c0_79, %c0_80, %c0_81] : memref<12x1x16x1xf32, #tpu.memory_space<vmem>>, vector<1x1x16x1xf32>
    %162 = vector.shape_cast %161 : vector<1x1x16x1xf32> to vector<16x1xf32>
    %163 = vector.shape_cast %160 : vector<16x1xf32> to vector<1x1x16x1xf32>
    tpu.vector_store %arg6[%c5_78, %c0_79, %c0_80, %c0_81], %163 {strides = array<i32>} : memref<12x1x16x1xf32, #tpu.memory_space<vmem>>, vector<1x1x16x1xf32>,
    %c1_i32_82 = arith.constant 1 : i32
    %164 = tpu.dynamic_rotate %96 by %c1_i32_82 dim 1 : vector<16x128xf32>, i32 -> vector<16x128xf32>
    %165 = vector.shape_cast %159 : vector<16x1xf32> to vector<16x1xf32>
    %166 = vector.broadcast %165 : vector<16x1xf32> to vector<16x128xf32>
    %167 = arith.select %8, %166, %164 : vector<16x128xi1>, vector<16x128xf32>
    %168 = arith.subf %96, %167 : vector<16x128xf32>
    %cst_83 = arith.constant 0.000000e+00 : f32
    %169 = vector.broadcast %cst_83 : f32 to vector<16x128xf32>
    %170 = arith.subf %169, %168 : vector<16x128xf32>
    %cst_84 = arith.constant 0.000000e+00 : f32
    %171 = vector.broadcast %cst_84 : f32 to vector<16x128xf32>
    %172 = arith.subf %171, %168 : vector<16x128xf32>
    %173 = arith.mulf %170, %172 : vector<16x128xf32>
    %174 = arith.addf %157, %173 : vector<16x128xf32>
    %c6_85 = arith.constant 6 : index
    %c0_86 = arith.constant 0 : index
    %c0_87 = arith.constant 0 : index
    %c0_88 = arith.constant 0 : index
    %175 = vector.load %arg6[%c6_85, %c0_86, %c0_87, %c0_88] : memref<12x1x16x1xf32, #tpu.memory_space<vmem>>, vector<1x1x16x1xf32>
    %176 = vector.shape_cast %175 : vector<1x1x16x1xf32> to vector<16x1xf32>
    %177 = vector.extract_strided_slice %100 {offsets = [0, 127], sizes = [16, 1], strides = [1, 1]} : vector<16x128xf32> to vector<16x1xf32>
    %c6_89 = arith.constant 6 : index
    %c0_90 = arith.constant 0 : index
    %c0_91 = arith.constant 0 : index
    %c0_92 = arith.constant 0 : index
    %178 = vector.load %arg6[%c6_89, %c0_90, %c0_91, %c0_92] : memref<12x1x16x1xf32, #tpu.memory_space<vmem>>, vector<1x1x16x1xf32>
    %179 = vector.shape_cast %178 : vector<1x1x16x1xf32> to vector<16x1xf32>
    %180 = vector.shape_cast %177 : vector<16x1xf32> to vector<1x1x16x1xf32>
    tpu.vector_store %arg6[%c6_89, %c0_90, %c0_91, %c0_92], %180 {strides = array<i32>} : memref<12x1x16x1xf32, #tpu.memory_space<vmem>>, vector<1x1x16x1xf32>,
    %c1_i32_93 = arith.constant 1 : i32
    %181 = tpu.dynamic_rotate %100 by %c1_i32_93 dim 1 : vector<16x128xf32>, i32 -> vector<16x128xf32>
    %182 = vector.shape_cast %176 : vector<16x1xf32> to vector<16x1xf32>
    %183 = vector.broadcast %182 : vector<16x1xf32> to vector<16x128xf32>
    %184 = arith.select %8, %183, %181 : vector<16x128xi1>, vector<16x128xf32>
    %185 = arith.subf %100, %184 : vector<16x128xf32>
    %cst_94 = arith.constant 0.000000e+00 : f32
    %186 = vector.broadcast %cst_94 : f32 to vector<16x128xf32>
    %187 = arith.subf %186, %185 : vector<16x128xf32>
    %cst_95 = arith.constant 0.000000e+00 : f32
    %188 = vector.broadcast %cst_95 : f32 to vector<16x128xf32>
    %189 = arith.subf %188, %185 : vector<16x128xf32>
    %190 = arith.mulf %187, %189 : vector<16x128xf32>
    %191 = arith.addf %174, %190 : vector<16x128xf32>
    %c7 = arith.constant 7 : index
    %c0_96 = arith.constant 0 : index
    %c0_97 = arith.constant 0 : index
    %c0_98 = arith.constant 0 : index
    %192 = vector.load %arg6[%c7, %c0_96, %c0_97, %c0_98] : memref<12x1x16x1xf32, #tpu.memory_space<vmem>>, vector<1x1x16x1xf32>
    %193 = vector.shape_cast %192 : vector<1x1x16x1xf32> to vector<16x1xf32>
    %194 = vector.extract_strided_slice %106 {offsets = [0, 127], sizes = [16, 1], strides = [1, 1]} : vector<16x128xf32> to vector<16x1xf32>
    %c7_99 = arith.constant 7 : index
    %c0_100 = arith.constant 0 : index
    %c0_101 = arith.constant 0 : index
    %c0_102 = arith.constant 0 : index
    %195 = vector.load %arg6[%c7_99, %c0_100, %c0_101, %c0_102] : memref<12x1x16x1xf32, #tpu.memory_space<vmem>>, vector<1x1x16x1xf32>
    %196 = vector.shape_cast %195 : vector<1x1x16x1xf32> to vector<16x1xf32>
    %197 = vector.shape_cast %194 : vector<16x1xf32> to vector<1x1x16x1xf32>
    tpu.vector_store %arg6[%c7_99, %c0_100, %c0_101, %c0_102], %197 {strides = array<i32>} : memref<12x1x16x1xf32, #tpu.memory_space<vmem>>, vector<1x1x16x1xf32>,
    %c1_i32_103 = arith.constant 1 : i32
    %198 = tpu.dynamic_rotate %106 by %c1_i32_103 dim 1 : vector<16x128xf32>, i32 -> vector<16x128xf32>
    %199 = vector.shape_cast %193 : vector<16x1xf32> to vector<16x1xf32>
    %200 = vector.broadcast %199 : vector<16x1xf32> to vector<16x128xf32>
    %201 = arith.select %8, %200, %198 : vector<16x128xi1>, vector<16x128xf32>
    %202 = arith.subf %106, %201 : vector<16x128xf32>
    %cst_104 = arith.constant 1.000000e+00 : f32
    %203 = vector.broadcast %cst_104 : f32 to vector<16x128xf32>
    %204 = arith.subf %203, %202 : vector<16x128xf32>
    %cst_105 = arith.constant 1.000000e+00 : f32
    %205 = vector.broadcast %cst_105 : f32 to vector<16x128xf32>
    %206 = arith.subf %205, %202 : vector<16x128xf32>
    %207 = arith.mulf %204, %206 : vector<16x128xf32>
    %208 = arith.addf %191, %207 : vector<16x128xf32>
    %c8 = arith.constant 8 : index
    %c0_106 = arith.constant 0 : index
    %c0_107 = arith.constant 0 : index
    %c0_108 = arith.constant 0 : index
    %209 = vector.load %arg6[%c8, %c0_106, %c0_107, %c0_108] : memref<12x1x16x1xf32, #tpu.memory_space<vmem>>, vector<1x1x16x1xf32>
    %210 = vector.shape_cast %209 : vector<1x1x16x1xf32> to vector<16x1xf32>
    %211 = vector.extract_strided_slice %110 {offsets = [0, 127], sizes = [16, 1], strides = [1, 1]} : vector<16x128xf32> to vector<16x1xf32>
    %c8_109 = arith.constant 8 : index
    %c0_110 = arith.constant 0 : index
    %c0_111 = arith.constant 0 : index
    %c0_112 = arith.constant 0 : index
    %212 = vector.load %arg6[%c8_109, %c0_110, %c0_111, %c0_112] : memref<12x1x16x1xf32, #tpu.memory_space<vmem>>, vector<1x1x16x1xf32>
    %213 = vector.shape_cast %212 : vector<1x1x16x1xf32> to vector<16x1xf32>
    %214 = vector.shape_cast %211 : vector<16x1xf32> to vector<1x1x16x1xf32>
    tpu.vector_store %arg6[%c8_109, %c0_110, %c0_111, %c0_112], %214 {strides = array<i32>} : memref<12x1x16x1xf32, #tpu.memory_space<vmem>>, vector<1x1x16x1xf32>,
    %c1_i32_113 = arith.constant 1 : i32
    %215 = tpu.dynamic_rotate %110 by %c1_i32_113 dim 1 : vector<16x128xf32>, i32 -> vector<16x128xf32>
    %216 = vector.shape_cast %210 : vector<16x1xf32> to vector<16x1xf32>
    %217 = vector.broadcast %216 : vector<16x1xf32> to vector<16x128xf32>
    %218 = arith.select %8, %217, %215 : vector<16x128xi1>, vector<16x128xf32>
    %219 = arith.subf %110, %218 : vector<16x128xf32>
    %cst_114 = arith.constant 0.000000e+00 : f32
    %220 = vector.broadcast %cst_114 : f32 to vector<16x128xf32>
    %221 = arith.subf %220, %219 : vector<16x128xf32>
    %cst_115 = arith.constant 0.000000e+00 : f32
    %222 = vector.broadcast %cst_115 : f32 to vector<16x128xf32>
    %223 = arith.subf %222, %219 : vector<16x128xf32>
    %224 = arith.mulf %221, %223 : vector<16x128xf32>
    %225 = arith.addf %208, %224 : vector<16x128xf32>
    %c9 = arith.constant 9 : index
    %c0_116 = arith.constant 0 : index
    %c0_117 = arith.constant 0 : index
    %c0_118 = arith.constant 0 : index
    %226 = vector.load %arg6[%c9, %c0_116, %c0_117, %c0_118] : memref<12x1x16x1xf32, #tpu.memory_space<vmem>>, vector<1x1x16x1xf32>
    %227 = vector.shape_cast %226 : vector<1x1x16x1xf32> to vector<16x1xf32>
    %228 = vector.extract_strided_slice %114 {offsets = [0, 127], sizes = [16, 1], strides = [1, 1]} : vector<16x128xf32> to vector<16x1xf32>
    %c9_119 = arith.constant 9 : index
    %c0_120 = arith.constant 0 : index
    %c0_121 = arith.constant 0 : index
    %c0_122 = arith.constant 0 : index
    %229 = vector.load %arg6[%c9_119, %c0_120, %c0_121, %c0_122] : memref<12x1x16x1xf32, #tpu.memory_space<vmem>>, vector<1x1x16x1xf32>
    %230 = vector.shape_cast %229 : vector<1x1x16x1xf32> to vector<16x1xf32>
    %231 = vector.shape_cast %228 : vector<16x1xf32> to vector<1x1x16x1xf32>
    tpu.vector_store %arg6[%c9_119, %c0_120, %c0_121, %c0_122], %231 {strides = array<i32>} : memref<12x1x16x1xf32, #tpu.memory_space<vmem>>, vector<1x1x16x1xf32>,
    %c1_i32_123 = arith.constant 1 : i32
    %232 = tpu.dynamic_rotate %114 by %c1_i32_123 dim 1 : vector<16x128xf32>, i32 -> vector<16x128xf32>
    %233 = vector.shape_cast %227 : vector<16x1xf32> to vector<16x1xf32>
    %234 = vector.broadcast %233 : vector<16x1xf32> to vector<16x128xf32>
    %235 = arith.select %8, %234, %232 : vector<16x128xi1>, vector<16x128xf32>
    %236 = arith.subf %114, %235 : vector<16x128xf32>
    %cst_124 = arith.constant 0.000000e+00 : f32
    %237 = vector.broadcast %cst_124 : f32 to vector<16x128xf32>
    %238 = arith.subf %237, %236 : vector<16x128xf32>
    %cst_125 = arith.constant 0.000000e+00 : f32
    %239 = vector.broadcast %cst_125 : f32 to vector<16x128xf32>
    %240 = arith.subf %239, %236 : vector<16x128xf32>
    %241 = arith.mulf %238, %240 : vector<16x128xf32>
    %242 = arith.addf %225, %241 : vector<16x128xf32>
    %c10 = arith.constant 10 : index
    %c0_126 = arith.constant 0 : index
    %c0_127 = arith.constant 0 : index
    %c0_128 = arith.constant 0 : index
    %243 = vector.load %arg6[%c10, %c0_126, %c0_127, %c0_128] : memref<12x1x16x1xf32, #tpu.memory_space<vmem>>, vector<1x1x16x1xf32>
    %244 = vector.shape_cast %243 : vector<1x1x16x1xf32> to vector<16x1xf32>
    %245 = vector.extract_strided_slice %118 {offsets = [0, 127], sizes = [16, 1], strides = [1, 1]} : vector<16x128xf32> to vector<16x1xf32>
    %c10_129 = arith.constant 10 : index
    %c0_130 = arith.constant 0 : index
    %c0_131 = arith.constant 0 : index
    %c0_132 = arith.constant 0 : index
    %246 = vector.load %arg6[%c10_129, %c0_130, %c0_131, %c0_132] : memref<12x1x16x1xf32, #tpu.memory_space<vmem>>, vector<1x1x16x1xf32>
    %247 = vector.shape_cast %246 : vector<1x1x16x1xf32> to vector<16x1xf32>
    %248 = vector.shape_cast %245 : vector<16x1xf32> to vector<1x1x16x1xf32>
    tpu.vector_store %arg6[%c10_129, %c0_130, %c0_131, %c0_132], %248 {strides = array<i32>} : memref<12x1x16x1xf32, #tpu.memory_space<vmem>>, vector<1x1x16x1xf32>,
    %c1_i32_133 = arith.constant 1 : i32
    %249 = tpu.dynamic_rotate %118 by %c1_i32_133 dim 1 : vector<16x128xf32>, i32 -> vector<16x128xf32>
    %250 = vector.shape_cast %244 : vector<16x1xf32> to vector<16x1xf32>
    %251 = vector.broadcast %250 : vector<16x1xf32> to vector<16x128xf32>
    %252 = arith.select %8, %251, %249 : vector<16x128xi1>, vector<16x128xf32>
    %253 = arith.subf %118, %252 : vector<16x128xf32>
    %cst_134 = arith.constant 0.000000e+00 : f32
    %254 = vector.broadcast %cst_134 : f32 to vector<16x128xf32>
    %255 = arith.subf %254, %253 : vector<16x128xf32>
    %cst_135 = arith.constant 0.000000e+00 : f32
    %256 = vector.broadcast %cst_135 : f32 to vector<16x128xf32>
    %257 = arith.subf %256, %253 : vector<16x128xf32>
    %258 = arith.mulf %255, %257 : vector<16x128xf32>
    %259 = arith.addf %242, %258 : vector<16x128xf32>
    %c11 = arith.constant 11 : index
    %c0_136 = arith.constant 0 : index
    %c0_137 = arith.constant 0 : index
    %c0_138 = arith.constant 0 : index
    %260 = vector.load %arg6[%c11, %c0_136, %c0_137, %c0_138] : memref<12x1x16x1xf32, #tpu.memory_space<vmem>>, vector<1x1x16x1xf32>
    %261 = vector.shape_cast %260 : vector<1x1x16x1xf32> to vector<16x1xf32>
    %262 = vector.extract_strided_slice %124 {offsets = [0, 127], sizes = [16, 1], strides = [1, 1]} : vector<16x128xf32> to vector<16x1xf32>
    %c11_139 = arith.constant 11 : index
    %c0_140 = arith.constant 0 : index
    %c0_141 = arith.constant 0 : index
    %c0_142 = arith.constant 0 : index
    %263 = vector.load %arg6[%c11_139, %c0_140, %c0_141, %c0_142] : memref<12x1x16x1xf32, #tpu.memory_space<vmem>>, vector<1x1x16x1xf32>
    %264 = vector.shape_cast %263 : vector<1x1x16x1xf32> to vector<16x1xf32>
    %265 = vector.shape_cast %262 : vector<16x1xf32> to vector<1x1x16x1xf32>
    tpu.vector_store %arg6[%c11_139, %c0_140, %c0_141, %c0_142], %265 {strides = array<i32>} : memref<12x1x16x1xf32, #tpu.memory_space<vmem>>, vector<1x1x16x1xf32>,
    %c1_i32_143 = arith.constant 1 : i32
    %266 = tpu.dynamic_rotate %124 by %c1_i32_143 dim 1 : vector<16x128xf32>, i32 -> vector<16x128xf32>
    %267 = vector.shape_cast %261 : vector<16x1xf32> to vector<16x1xf32>
    %268 = vector.broadcast %267 : vector<16x1xf32> to vector<16x128xf32>
    %269 = arith.select %8, %268, %266 : vector<16x128xi1>, vector<16x128xf32>
    %270 = arith.subf %124, %269 : vector<16x128xf32>
    %cst_144 = arith.constant 1.000000e+00 : f32
    %271 = vector.broadcast %cst_144 : f32 to vector<16x128xf32>
    %272 = arith.subf %271, %270 : vector<16x128xf32>
    %cst_145 = arith.constant 1.000000e+00 : f32
    %273 = vector.broadcast %cst_145 : f32 to vector<16x128xf32>
    %274 = arith.subf %273, %270 : vector<16x128xf32>
    %275 = arith.mulf %272, %274 : vector<16x128xf32>
    %276 = arith.addf %259, %275 : vector<16x128xf32>
    %c1_i32_146 = arith.constant 1 : i32
    %277 = vector.broadcast %c1_i32_146 : i32 to vector<16x128xi32>
    %278 = arith.cmpi sge, %6, %277 : vector<16x128xi32>
    %c7_i32_147 = arith.constant 7 : i32
    %279 = vector.broadcast %c7_i32_147 : i32 to vector<16x128xi32>
    %280 = arith.cmpi sle, %6, %279 : vector<16x128xi32>
    %281 = arith.andi %278, %280 : vector<16x128xi1>
    %cst_148 = arith.constant 0.000000e+00 : f32
    %282 = vector.broadcast %cst_148 : f32 to vector<16x128xf32>
    %283 = arith.select %281, %276, %282 : vector<16x128xi1>, vector<16x128xf32>
    %284 = math.sqrt %283 : vector<16x128xf32>
    %c0_149 = arith.constant 0 : index
    %c0_150 = arith.constant 0 : index
    %285 = vector.load %arg5[%c0_149, %c0_150] : memref<16x1xf32, #tpu.memory_space<vmem>>, vector<16x1xf32>
    %cst_151 = arith.constant dense<0.000000e+00> : vector<16xf32>
    %286 = vector.multi_reduction <add>, %284, %cst_151 [1] : vector<16x128xf32> to vector<16xf32>
    %287 = vector.shape_cast %286 : vector<16xf32> to vector<16x1xf32>
    %288 = arith.addf %285, %287 : vector<16x1xf32>
    %c0_152 = arith.constant 0 : index
    %c0_153 = arith.constant 0 : index
    %289 = vector.load %arg5[%c0_152, %c0_153] : memref<16x1xf32, #tpu.memory_space<vmem>>, vector<16x1xf32>
    tpu.vector_store %arg5[%c0_152, %c0_153], %288 {strides = array<i32>} : memref<16x1xf32, #tpu.memory_space<vmem>>, vector<16x1xf32>,
    %c0_i32_154 = arith.constant 0 : i32
    %290 = arith.cmpi eq, %arg0, %c0_i32_154 : i32
    %291 = arith.extui %290 : i1 to i32
    %c0_i32_155 = arith.constant 0 : i32
    %292 = arith.cmpi ne, %291, %c0_i32_155 : i32
    scf.if %292 {
      %c0_156 = arith.constant 0 : index
      %c0_157 = arith.constant 0 : index
      %293 = vector.load %arg2[%c0_156, %c0_157] : memref<16x1xf32, #tpu.memory_space<vmem>>, vector<16x1xf32>
      %c0_158 = arith.constant 0 : index
      %c0_159 = arith.constant 0 : index
      %294 = vector.load %arg4[%c0_158, %c0_159] : memref<16x1xf32, #tpu.memory_space<vmem>>, vector<16x1xf32>
      %295 = arith.mulf %294, %293 : vector<16x1xf32>
      %296 = vector.shape_cast %295 : vector<16x1xf32> to vector<1x16x1xf32>
      %cst_160 = arith.constant dense<0.000000e+00> : vector<1xf32>
      %297 = vector.multi_reduction <add>, %296, %cst_160 [1, 2] : vector<1x16x1xf32> to vector<1xf32>
      %298 = vector.shape_cast %297 : vector<1xf32> to vector<1x1x1xf32>
      %299 = vector.extract %298[0, 0, 0] : f32 from vector<1x1x1xf32>
      %cst_161 = arith.constant 1.120000e+02 : f32
      %300 = arith.divf %299, %cst_161 : f32
      %cst_162 = arith.constant 0.000000e+00 : f32
      %301 = arith.addf %cst_162, %300 : f32
      %c0_163 = arith.constant 0 : index
      %c0_164 = arith.constant 0 : index
      %302 = vector.load %arg5[%c0_163, %c0_164] : memref<16x1xf32, #tpu.memory_space<vmem>>, vector<16x1xf32>
      %303 = arith.mulf %302, %293 : vector<16x1xf32>
      %304 = vector.shape_cast %303 : vector<16x1xf32> to vector<1x16x1xf32>
      %cst_165 = arith.constant dense<0.000000e+00> : vector<1xf32>
      %305 = vector.multi_reduction <add>, %304, %cst_165 [1, 2] : vector<1x16x1xf32> to vector<1xf32>
      %306 = vector.shape_cast %305 : vector<1xf32> to vector<1x1x1xf32>
      %307 = vector.extract %306[0, 0, 0] : f32 from vector<1x1x1xf32>
      %cst_166 = arith.constant 1.120000e+02 : f32
      %308 = arith.divf %307, %cst_166 : f32
      %309 = arith.addf %301, %308 : f32
      %c0_167 = arith.constant 0 : index
      %c0_168 = arith.constant 0 : index
      %310 = memref.load %arg3[%c0_167, %c0_168] : memref<1x1xf32, #tpu.memory_space<smem>>
      memref.store %309, %arg3[%c0_167, %c0_168] : memref<1x1xf32, #tpu.memory_space<smem>>
    } else {
    }
    return
  }
  func.func @transform_0(%arg0: i32) -> (i32, i32, i32) {
    %c0_i32 = arith.constant 0 : i32
    %c0_i32_0 = arith.constant 0 : i32
    %c0_i32_1 = arith.constant 0 : i32
    return %c0_i32, %c0_i32_0, %arg0 : i32, i32, i32
  }
  func.func @transform_1(%arg0: i32) -> (i32, i32) {
    %c0_i32 = arith.constant 0 : i32
    %c0_i32_0 = arith.constant 0 : i32
    %c0_i32_1 = arith.constant 0 : i32
    return %c0_i32, %c0_i32_0 : i32, i32
  }
  func.func @transform_2(%arg0: i32) -> (i32, i32) {
    %c0_i32 = arith.constant 0 : i32
    %c0_i32_0 = arith.constant 0 : i32
    %c0_i32_1 = arith.constant 0 : i32
    return %c0_i32, %c0_i32_0 : i32, i32
  }
}

</mosaic_0001>

<llo_original>
// kernel: tpu_custom_call.1
$region0: #{tpu_custom_call.1}
  #allocation0 [shape = 'u32[]', space=smem, size = 0x4, offset = 0x4, fixed_abs, tag = 'smem constant byte address 0x4 - core index']
  #allocation1 [shape = 'u32[144,128]{1,0:T(1,128)}', space=vmem, size = 0x12000, scoped, tag = 'internal scratch']
  #allocation2 [shape = 'f32[16,1]{1,0:T(8,128)}', space=vmem, size = 0x2000, scoped, tag = 'scratch operand']
  #allocation3 [shape = 'f32[16,1]{1,0:T(8,128)}', space=vmem, size = 0x2000, scoped, tag = 'scratch operand']
  #allocation4 [shape = 'f32[12,1,16,1]{3,2,1,0:T(8,128)}', space=vmem, size = 0x18000, scoped, tag = 'scratch operand']
  %s0 = inlined_call_operand.vmem [shape: f32[7,16,8], index: 0, kind: input, shape index: {}]
  %s1 = inlined_call_operand.vmem [shape: f32[16,1], index: 1, kind: input, shape index: {}]
  %s2 = inlined_call_operand.hbm [shape: f32[1,1], index: 2, kind: output, shape index: {}]
  %s3 = sld [smem:[#allocation0]]
  $region26: #{tpu_custom_call.1} parent=0
    _
  %s5 = ssub.s32 1, %s3
  %s6 = scalar_select 0, %s5, %s3
  $region1: #{tpu_custom_call.1} parent=0
    #allocation5 [shape = 'u8[512]{0}', space=smem, size = 0x200, scoped, tag = 'output window, operand 0, single buffered']
    #allocation6 [shape = 's32[1]{0}', space=sflag, size = 0x4, scoped, tag = 'scoped memory for tpu_custom_call.1']
    %7 = vsyncpa [#allocation6], 0
    // Predicated region
    $region2: #{tpu_custom_call.1} parent=1 // pred_check
      _
    $region3: #{tpu_custom_call.1} parent=1 // pred_check_branch
      %9 = sbr.rel (0) target = $region5
    $region4: #{tpu_custom_call.1} parent=1 // pred_region
      _
    $region5: #{tpu_custom_call.1} parent=1 // pred_fallthru
      _
    // Predicated region
    $region6: #{tpu_custom_call.1} parent=1 // pred_check
      _
    $region7: #{tpu_custom_call.1} parent=1 // pred_check_branch
      %11 = sbr.rel (0) target = $region9
    $region8: #{tpu_custom_call.1} parent=1 // pred_region
      _
    $region9: #{tpu_custom_call.1} parent=1 // pred_fallthru
      _
    %p12 = scmp.eq.s32.totalorder 0, 0
    // Predicated region
    $region10: #{tpu_custom_call.1} parent=1 // pred_check
      %p13 = pneg %p12
    $region11: #{tpu_custom_call.1} parent=1 // pred_check_branch
      %15 = sbr.rel (%p13) target = $region13
    $region12: #{tpu_custom_call.1} parent=1 // pred_region
      %vm16 = vcmask 7168
      %17 = vst.msk [vmem:[#allocation2] sm:$0xff] %vm16, 0.0
      %18 = vst.msk [vmem:[#allocation2 + $0x8] sm:$0xff] %vm16, 0.0
      %19 = vst.msk [vmem:[#allocation3] sm:$0xff] %vm16, 0.0
      %20 = vst.msk [vmem:[#allocation3 + $0x8] sm:$0xff] %vm16, 0.0
      %21 = vst.msk [vmem:[#allocation4] sm:$0xff] %vm16, 0.0
      %22 = vst.msk [vmem:[#allocation4 + $0x8] sm:$0xff] %vm16, 0.0
      %23 = vst.msk [vmem:[#allocation4 + $0x10] sm:$0xff] %vm16, 0.0
      %24 = vst.msk [vmem:[#allocation4 + $0x18] sm:$0xff] %vm16, 0.0
      %25 = vst.msk [vmem:[#allocation4 + $0x20] sm:$0xff] %vm16, 0.0
      %26 = vst.msk [vmem:[#allocation4 + $0x28] sm:$0xff] %vm16, 0.0
      %27 = vst.msk [vmem:[#allocation4 + $0x30] sm:$0xff] %vm16, 0.0
      %28 = vst.msk [vmem:[#allocation4 + $0x38] sm:$0xff] %vm16, 0.0
      %29 = vst.msk [vmem:[#allocation4 + $0x40] sm:$0xff] %vm16, 0.0
      %30 = vst.msk [vmem:[#allocation4 + $0x48] sm:$0xff] %vm16, 0.0
      %31 = vst.msk [vmem:[#allocation4 + $0x50] sm:$0xff] %vm16, 0.0
      %32 = vst.msk [vmem:[#allocation4 + $0x58] sm:$0xff] %vm16, 0.0
      %33 = vst.msk [vmem:[#allocation4 + $0x60] sm:$0xff] %vm16, 0.0
      %34 = vst.msk [vmem:[#allocation4 + $0x68] sm:$0xff] %vm16, 0.0
      %35 = vst.msk [vmem:[#allocation4 + $0x70] sm:$0xff] %vm16, 0.0
      %36 = vst.msk [vmem:[#allocation4 + $0x78] sm:$0xff] %vm16, 0.0
      %37 = vst.msk [vmem:[#allocation4 + $0x80] sm:$0xff] %vm16, 0.0
      %38 = vst.msk [vmem:[#allocation4 + $0x88] sm:$0xff] %vm16, 0.0
      %39 = vst.msk [vmem:[#allocation4 + $0x90] sm:$0xff] %vm16, 0.0
      %40 = vst.msk [vmem:[#allocation4 + $0x98] sm:$0xff] %vm16, 0.0
      %41 = vst.msk [vmem:[#allocation4 + $0xa0] sm:$0xff] %vm16, 0.0
      %42 = vst.msk [vmem:[#allocation4 + $0xa8] sm:$0xff] %vm16, 0.0
      %43 = vst.msk [vmem:[#allocation4 + $0xb0] sm:$0xff] %vm16, 0.0
      %44 = vst.msk [vmem:[#allocation4 + $0xb8] sm:$0xff] %vm16, 0.0
    $region13: #{tpu_custom_call.1} parent=1 // pred_fallthru
      _
    %v45 = vlaneseq
    %v46 = vand.u32 %v45, 127
    %s47 = smul.u32 0, 128
    %v48 = vstv %s47
    %v49 = vadd.s32 %v46, %v48
    %vm50 = vcmp.eq.s32.totalorder %v46, 0
    %v51 = vld [vmem:[%s0] sm:$0xff]
    %v52 = vld [vmem:[%s0 + $0x8] sm:$0xff]
    %v53 = vld [vmem:[#allocation4] sm:$0xff]
    %v54 = vld [vmem:[#allocation4 + $0x8] sm:$0xff]
    %57 = vrot.lane.b32.xlu0 %v51, 1
    %v58 = vpop.permute.xlu0 %57
    %59 = vrot.lane.b32.xlu0 %v52, 1
    %v60 = vpop.permute.xlu0 %59
    %vm63 = vcmask 7168
    %64 = vst.msk [vmem:[#allocation4] sm:$0xff] %vm63, %v58
    %65 = vst.msk [vmem:[#allocation4 + $0x8] sm:$0xff] %vm63, %v60
    %66 = vrot.lane.b32.xlu0 %v51, 1
    %v67 = vpop.permute.xlu0 %66
    %68 = vrot.lane.b32.xlu0 %v52, 1
    %v69 = vpop.permute.xlu0 %68
    %71 = vset.pattern.permute.xlu0 0
    %72 = vperm.xlu0 %71, %v53
    %v73 = vpop.permute.xlu0 %72
    %76 = vset.pattern.permute.xlu0 0
    %77 = vperm.xlu0 %76, %v54
    %v78 = vpop.permute.xlu0 %77
    %v80 = vsel %vm50, %v73, %v67
    %v81 = vsel %vm50, %v78, %v69
    %v82 = vsub.f32 %v51, %v80
    %v83 = vsub.f32 %v52, %v81
    %s84 = scalar_lea.vmem %s0, 16
    %v85 = vld [vmem:[%s84] sm:$0xff]
    %v86 = vld [vmem:[%s84 + $0x8] sm:$0xff]
    %s87 = scalar_lea.vmem [#allocation4], 16
    %v88 = vld [vmem:[%s87] sm:$0xff]
    %v89 = vld [vmem:[%s87 + $0x8] sm:$0xff]
    %92 = vrot.lane.b32.xlu0 %v85, 1
    %v93 = vpop.permute.xlu0 %92
    %94 = vrot.lane.b32.xlu0 %v86, 1
    %v95 = vpop.permute.xlu0 %94
    %98 = vst.msk [vmem:[%s87] sm:$0xff] %vm63, %v93
    %99 = vst.msk [vmem:[%s87 + $0x8] sm:$0xff] %vm63, %v95
    %100 = vrot.lane.b32.xlu0 %v85, 1
    %v101 = vpop.permute.xlu0 %100
    %102 = vrot.lane.b32.xlu0 %v86, 1
    %v103 = vpop.permute.xlu0 %102
    %105 = vset.pattern.permute.xlu0 0
    %106 = vperm.xlu0 %105, %v88
    %v107 = vpop.permute.xlu0 %106
    %110 = vset.pattern.permute.xlu0 0
    %111 = vperm.xlu0 %110, %v89
    %v112 = vpop.permute.xlu0 %111
    %v114 = vsel %vm50, %v107, %v101
    %v115 = vsel %vm50, %v112, %v103
    %v116 = vsub.f32 %v85, %v114
    %v117 = vsub.f32 %v86, %v115
    %s118 = scalar_lea.vmem %s0, 32
    %v119 = vld [vmem:[%s118] sm:$0xff]
    %v120 = vld [vmem:[%s118 + $0x8] sm:$0xff]
    %s121 = scalar_lea.vmem [#allocation4], 32
    %v122 = vld [vmem:[%s121] sm:$0xff]
    %v123 = vld [vmem:[%s121 + $0x8] sm:$0xff]
    %126 = vrot.lane.b32.xlu0 %v119, 1
    %v127 = vpop.permute.xlu0 %126
    %128 = vrot.lane.b32.xlu0 %v120, 1
    %v129 = vpop.permute.xlu0 %128
    %132 = vst.msk [vmem:[%s121] sm:$0xff] %vm63, %v127
    %133 = vst.msk [vmem:[%s121 + $0x8] sm:$0xff] %vm63, %v129
    %134 = vrot.lane.b32.xlu0 %v119, 1
    %v135 = vpop.permute.xlu0 %134
    %136 = vrot.lane.b32.xlu0 %v120, 1
    %v137 = vpop.permute.xlu0 %136
    %139 = vset.pattern.permute.xlu0 0
    %140 = vperm.xlu0 %139, %v122
    %v141 = vpop.permute.xlu0 %140
    %144 = vset.pattern.permute.xlu0 0
    %145 = vperm.xlu0 %144, %v123
    %v146 = vpop.permute.xlu0 %145
    %v148 = vsel %vm50, %v141, %v135
    %v149 = vsel %vm50, %v146, %v137
    %v150 = vsub.f32 %v119, %v148
    %v151 = vsub.f32 %v120, %v149
    %v152 = vmul.f32 %v82, %v82
    %v153 = vmul.f32 %v83, %v83
    %v154 = vmul.f32 %v116, %v116
    %v155 = vmul.f32 %v117, %v117
    %v156 = vadd.f32 %v152, %v154
    %v157 = vadd.f32 %v153, %v155
    %v158 = vmul.f32 %v150, %v150
    %v159 = vmul.f32 %v151, %v151
    %v160 = vadd.f32 %v156, %v158
    %v161 = vadd.f32 %v157, %v159
    %vm162 = vcmp.ge.s32.totalorder %v49, 1
    %vm163 = vcmp.le.s32.totalorder %v49, 7
    %vm164 = vmand %vm162, %vm163
    %v165 = vsel %vm164, %v160, 0.0
    %v166 = vsel %vm164, %v161, 0.0
    %v167 = vrsqrt.pop %v165
    %v168 = vmul.f32 %v165, %v167
    %vm169 = vcmp.eq.f32.partialorder %v165, inf
    %v170 = vsel %vm169, %v165, %v168
    %vm171 = vcmp.eq.f32.partialorder %v165, 0.0
    %v172 = vand.u32 %v165, 2147483648
    %v173 = vsel %vm171, %v172, %v170
    %v174 = vrsqrt.pop %v166
    %v175 = vmul.f32 %v166, %v174
    %vm176 = vcmp.eq.f32.partialorder %v166, inf
    %v177 = vsel %vm176, %v166, %v175
    %vm178 = vcmp.eq.f32.partialorder %v166, 0.0
    %v179 = vand.u32 %v166, 2147483648
    %v180 = vsel %vm178, %v179, %v177
    %v181 = vld [vmem:[#allocation2] sm:$0xff]
    %v182 = vld [vmem:[#allocation2 + $0x8] sm:$0xff]
    %183 = vadd.xlane.f32.xlu0 %v173
    %v184 = vpop.xlane.xlu0 %183
    %185 = vadd.xlane.f32.xlu0 %v180
    %v186 = vpop.xlane.xlu0 %185
    %v187 = vadd.f32 %v181, %v184
    %v188 = vadd.f32 %v182, %v186
    %189 = vst.msk [vmem:[#allocation2] sm:$0xff] %vm63, %v187
    %190 = vst.msk [vmem:[#allocation2 + $0x8] sm:$0xff] %vm63, %v188
    %s191 = scalar_lea.vmem %s0, 48
    %v192 = vld [vmem:[%s191] sm:$0xff]
    %v193 = vld [vmem:[%s191 + $0x8] sm:$0xff]
    %s194 = scalar_lea.vmem %s0, 64
    %v195 = vld [vmem:[%s194] sm:$0xff]
    %v196 = vld [vmem:[%s194 + $0x8] sm:$0xff]
    %s197 = scalar_lea.vmem %s0, 80
    %v198 = vld [vmem:[%s197] sm:$0xff]
    %v199 = vld [vmem:[%s197 + $0x8] sm:$0xff]
    %s200 = scalar_lea.vmem %s0, 96
    %v201 = vld [vmem:[%s200] sm:$0xff]
    %v202 = vld [vmem:[%s200 + $0x8] sm:$0xff]
    %v203 = vmul.f32 %v192, %v192
    %v204 = vmul.f32 %v193, %v193
    %v205 = vmul.f32 %v195, %v195
    %v206 = vmul.f32 %v196, %v196
    %v207 = vadd.f32 %v203, %v205
    %v208 = vadd.f32 %v204, %v206
    %v209 = vmul.f32 %v198, %v198
    %v210 = vmul.f32 %v199, %v199
    %v211 = vadd.f32 %v207, %v209
    %v212 = vadd.f32 %v208, %v210
    %v213 = vmul.f32 %v201, %v201
    %v214 = vmul.f32 %v202, %v202
    %v215 = vadd.f32 %v211, %v213
    %v216 = vadd.f32 %v212, %v214
    %v217 = vrcp.pop %v215
    %v218 = vmul.f32 2.0, %v217
    %v219 = vrcp.pop %v216
    %v220 = vmul.f32 2.0, %v219
    %v221 = vadd.f32 %v209, %v213
    %v222 = vadd.f32 %v210, %v214
    %v223 = vmul.f32 %v218, %v221
    %v224 = vmul.f32 %v220, %v222
    %v225 = vsub.f32 1.0, %v223
    %v226 = vsub.f32 1.0, %v224
    %v227 = vmul.f32 %v195, %v198
    %v228 = vmul.f32 %v196, %v199
    %v229 = vmul.f32 %v201, %v192
    %v230 = vmul.f32 %v202, %v193
    %v231 = vsub.f32 %v227, %v229
    %v232 = vsub.f32 %v228, %v230
    %v233 = vmul.f32 %v218, %v231
    %v234 = vmul.f32 %v220, %v232
    %v235 = vmul.f32 %v195, %v201
    %v236 = vmul.f32 %v196, %v202
    %v237 = vmul.f32 %v198, %v192
    %v238 = vmul.f32 %v199, %v193
    %v239 = vadd.f32 %v235, %v237
    %v240 = vadd.f32 %v236, %v238
    %v241 = vmul.f32 %v218, %v239
    %v242 = vmul.f32 %v220, %v240
    %v243 = vadd.f32 %v227, %v229
    %v244 = vadd.f32 %v228, %v230
    %v245 = vmul.f32 %v218, %v243
    %v246 = vmul.f32 %v220, %v244
    %v247 = vadd.f32 %v205, %v213
    %v248 = vadd.f32 %v206, %v214
    %v249 = vmul.f32 %v218, %v247
    %v250 = vmul.f32 %v220, %v248
    %v251 = vsub.f32 1.0, %v249
    %v252 = vsub.f32 1.0, %v250
    %v253 = vmul.f32 %v198, %v201
    %v254 = vmul.f32 %v199, %v202
    %v255 = vmul.f32 %v195, %v192
    %v256 = vmul.f32 %v196, %v193
    %v257 = vsub.f32 %v253, %v255
    %v258 = vsub.f32 %v254, %v256
    %v259 = vmul.f32 %v218, %v257
    %v260 = vmul.f32 %v220, %v258
    %v261 = vsub.f32 %v235, %v237
    %v262 = vsub.f32 %v236, %v238
    %v263 = vmul.f32 %v218, %v261
    %v264 = vmul.f32 %v220, %v262
    %v265 = vadd.f32 %v253, %v255
    %v266 = vadd.f32 %v254, %v256
    %v267 = vmul.f32 %v218, %v265
    %v268 = vmul.f32 %v220, %v266
    %v269 = vadd.f32 %v205, %v209
    %v270 = vadd.f32 %v206, %v210
    %v271 = vmul.f32 %v218, %v269
    %v272 = vmul.f32 %v220, %v270
    %v273 = vsub.f32 1.0, %v271
    %v274 = vsub.f32 1.0, %v272
    %s275 = scalar_lea.vmem [#allocation4], 48
    %v276 = vld [vmem:[%s275] sm:$0xff]
    %v277 = vld [vmem:[%s275 + $0x8] sm:$0xff]
    %280 = vrot.lane.b32.xlu0 %v225, 1
    %v281 = vpop.permute.xlu0 %280
    %282 = vrot.lane.b32.xlu0 %v226, 1
    %v283 = vpop.permute.xlu0 %282
    %286 = vst.msk [vmem:[%s275] sm:$0xff] %vm63, %v281
    %287 = vst.msk [vmem:[%s275 + $0x8] sm:$0xff] %vm63, %v283
    %288 = vrot.lane.b32.xlu0 %v225, 1
    %v289 = vpop.permute.xlu0 %288
    %290 = vrot.lane.b32.xlu0 %v226, 1
    %v291 = vpop.permute.xlu0 %290
    %293 = vset.pattern.permute.xlu0 0
    %294 = vperm.xlu0 %293, %v276
    %v295 = vpop.permute.xlu0 %294
    %298 = vset.pattern.permute.xlu0 0
    %299 = vperm.xlu0 %298, %v277
    %v300 = vpop.permute.xlu0 %299
    %v302 = vsel %vm50, %v295, %v289
    %v303 = vsel %vm50, %v300, %v291
    %v304 = vsub.f32 %v225, %v302
    %v305 = vsub.f32 %v226, %v303
    %v306 = vsub.f32 1.0, %v304
    %v307 = vsub.f32 1.0, %v305
    %v308 = vmul.f32 %v306, %v306
    %v309 = vmul.f32 %v307, %v307
    %s310 = scalar_lea.vmem [#allocation4], 64
    %v311 = vld [vmem:[%s310] sm:$0xff]
    %v312 = vld [vmem:[%s310 + $0x8] sm:$0xff]
    %315 = vrot.lane.b32.xlu0 %v233, 1
    %v316 = vpop.permute.xlu0 %315
    %317 = vrot.lane.b32.xlu0 %v234, 1
    %v318 = vpop.permute.xlu0 %317
    %321 = vst.msk [vmem:[%s310] sm:$0xff] %vm63, %v316
    %322 = vst.msk [vmem:[%s310 + $0x8] sm:$0xff] %vm63, %v318
    %323 = vrot.lane.b32.xlu0 %v233, 1
    %v324 = vpop.permute.xlu0 %323
    %325 = vrot.lane.b32.xlu0 %v234, 1
    %v326 = vpop.permute.xlu0 %325
    %328 = vset.pattern.permute.xlu0 0
    %329 = vperm.xlu0 %328, %v311
    %v330 = vpop.permute.xlu0 %329
    %333 = vset.pattern.permute.xlu0 0
    %334 = vperm.xlu0 %333, %v312
    %v335 = vpop.permute.xlu0 %334
    %v337 = vsel %vm50, %v330, %v324
    %v338 = vsel %vm50, %v335, %v326
    %v339 = vsub.f32 %v233, %v337
    %v340 = vsub.f32 %v234, %v338
    %v341 = vsub.f32 0.0, %v339
    %v342 = vsub.f32 0.0, %v340
    %v343 = vmul.f32 %v341, %v341
    %v344 = vmul.f32 %v342, %v342
    %v345 = vadd.f32 %v308, %v343
    %v346 = vadd.f32 %v309, %v344
    %s347 = scalar_lea.vmem [#allocation4], 80
    %v348 = vld [vmem:[%s347] sm:$0xff]
    %v349 = vld [vmem:[%s347 + $0x8] sm:$0xff]
    %352 = vrot.lane.b32.xlu0 %v241, 1
    %v353 = vpop.permute.xlu0 %352
    %354 = vrot.lane.b32.xlu0 %v242, 1
    %v355 = vpop.permute.xlu0 %354
    %358 = vst.msk [vmem:[%s347] sm:$0xff] %vm63, %v353
    %359 = vst.msk [vmem:[%s347 + $0x8] sm:$0xff] %vm63, %v355
    %360 = vrot.lane.b32.xlu0 %v241, 1
    %v361 = vpop.permute.xlu0 %360
    %362 = vrot.lane.b32.xlu0 %v242, 1
    %v363 = vpop.permute.xlu0 %362
    %365 = vset.pattern.permute.xlu0 0
    %366 = vperm.xlu0 %365, %v348
    %v367 = vpop.permute.xlu0 %366
    %370 = vset.pattern.permute.xlu0 0
    %371 = vperm.xlu0 %370, %v349
    %v372 = vpop.permute.xlu0 %371
    %v374 = vsel %vm50, %v367, %v361
    %v375 = vsel %vm50, %v372, %v363
    %v376 = vsub.f32 %v241, %v374
    %v377 = vsub.f32 %v242, %v375
    %v378 = vsub.f32 0.0, %v376
    %v379 = vsub.f32 0.0, %v377
    %v380 = vmul.f32 %v378, %v378
    %v381 = vmul.f32 %v379, %v379
    %v382 = vadd.f32 %v345, %v380
    %v383 = vadd.f32 %v346, %v381
    %s384 = scalar_lea.vmem [#allocation4], 96
    %v385 = vld [vmem:[%s384] sm:$0xff]
    %v386 = vld [vmem:[%s384 + $0x8] sm:$0xff]
    %389 = vrot.lane.b32.xlu0 %v245, 1
    %v390 = vpop.permute.xlu0 %389
    %391 = vrot.lane.b32.xlu0 %v246, 1
    %v392 = vpop.permute.xlu0 %391
    %395 = vst.msk [vmem:[%s384] sm:$0xff] %vm63, %v390
    %396 = vst.msk [vmem:[%s384 + $0x8] sm:$0xff] %vm63, %v392
    %397 = vrot.lane.b32.xlu0 %v245, 1
    %v398 = vpop.permute.xlu0 %397
    %399 = vrot.lane.b32.xlu0 %v246, 1
    %v400 = vpop.permute.xlu0 %399
    %402 = vset.pattern.permute.xlu0 0
    %403 = vperm.xlu0 %402, %v385
    %v404 = vpop.permute.xlu0 %403
    %407 = vset.pattern.permute.xlu0 0
    %408 = vperm.xlu0 %407, %v386
    %v409 = vpop.permute.xlu0 %408
    %v411 = vsel %vm50, %v404, %v398
    %v412 = vsel %vm50, %v409, %v400
    %v413 = vsub.f32 %v245, %v411
    %v414 = vsub.f32 %v246, %v412
    %v415 = vsub.f32 0.0, %v413
    %v416 = vsub.f32 0.0, %v414
    %v417 = vmul.f32 %v415, %v415
    %v418 = vmul.f32 %v416, %v416
    %v419 = vadd.f32 %v382, %v417
    %v420 = vadd.f32 %v383, %v418
    %s421 = scalar_lea.vmem [#allocation4], 112
    %v422 = vld [vmem:[%s421] sm:$0xff]
    %v423 = vld [vmem:[%s421 + $0x8] sm:$0xff]
    %426 = vrot.lane.b32.xlu0 %v251, 1
    %v427 = vpop.permute.xlu0 %426
    %428 = vrot.lane.b32.xlu0 %v252, 1
    %v429 = vpop.permute.xlu0 %428
    %432 = vst.msk [vmem:[%s421] sm:$0xff] %vm63, %v427
    %433 = vst.msk [vmem:[%s421 + $0x8] sm:$0xff] %vm63, %v429
    %434 = vrot.lane.b32.xlu0 %v251, 1
    %v435 = vpop.permute.xlu0 %434
    %436 = vrot.lane.b32.xlu0 %v252, 1
    %v437 = vpop.permute.xlu0 %436
    %439 = vset.pattern.permute.xlu0 0
    %440 = vperm.xlu0 %439, %v422
    %v441 = vpop.permute.xlu0 %440
    %444 = vset.pattern.permute.xlu0 0
    %445 = vperm.xlu0 %444, %v423
    %v446 = vpop.permute.xlu0 %445
    %v448 = vsel %vm50, %v441, %v435
    %v449 = vsel %vm50, %v446, %v437
    %v450 = vsub.f32 %v251, %v448
    %v451 = vsub.f32 %v252, %v449
    %v452 = vsub.f32 1.0, %v450
    %v453 = vsub.f32 1.0, %v451
    %v454 = vmul.f32 %v452, %v452
    %v455 = vmul.f32 %v453, %v453
    %v456 = vadd.f32 %v419, %v454
    %v457 = vadd.f32 %v420, %v455
    %s458 = scalar_lea.vmem [#allocation4], 128
    %v459 = vld [vmem:[%s458] sm:$0xff]
    %v460 = vld [vmem:[%s458 + $0x8] sm:$0xff]
    %463 = vrot.lane.b32.xlu0 %v259, 1
    %v464 = vpop.permute.xlu0 %463
    %465 = vrot.lane.b32.xlu0 %v260, 1
    %v466 = vpop.permute.xlu0 %465
    %469 = vst.msk [vmem:[%s458] sm:$0xff] %vm63, %v464
    %470 = vst.msk [vmem:[%s458 + $0x8] sm:$0xff] %vm63, %v466
    %471 = vrot.lane.b32.xlu0 %v259, 1
    %v472 = vpop.permute.xlu0 %471
    %473 = vrot.lane.b32.xlu0 %v260, 1
    %v474 = vpop.permute.xlu0 %473
    %476 = vset.pattern.permute.xlu0 0
    %477 = vperm.xlu0 %476, %v459
    %v478 = vpop.permute.xlu0 %477
    %481 = vset.pattern.permute.xlu0 0
    %482 = vperm.xlu0 %481, %v460
    %v483 = vpop.permute.xlu0 %482
    %v485 = vsel %vm50, %v478, %v472
    %v486 = vsel %vm50, %v483, %v474
    %v487 = vsub.f32 %v259, %v485
    %v488 = vsub.f32 %v260, %v486
    %v489 = vsub.f32 0.0, %v487
    %v490 = vsub.f32 0.0, %v488
    %v491 = vmul.f32 %v489, %v489
    %v492 = vmul.f32 %v490, %v490
    %v493 = vadd.f32 %v456, %v491
    %v494 = vadd.f32 %v457, %v492
    %s495 = scalar_lea.vmem [#allocation4], 144
    %v496 = vld [vmem:[%s495] sm:$0xff]
    %v497 = vld [vmem:[%s495 + $0x8] sm:$0xff]
    %500 = vrot.lane.b32.xlu0 %v263, 1
    %v501 = vpop.permute.xlu0 %500
    %502 = vrot.lane.b32.xlu0 %v264, 1
    %v503 = vpop.permute.xlu0 %502
    %506 = vst.msk [vmem:[%s495] sm:$0xff] %vm63, %v501
    %507 = vst.msk [vmem:[%s495 + $0x8] sm:$0xff] %vm63, %v503
    %508 = vrot.lane.b32.xlu0 %v263, 1
    %v509 = vpop.permute.xlu0 %508
    %510 = vrot.lane.b32.xlu0 %v264, 1
    %v511 = vpop.permute.xlu0 %510
    %513 = vset.pattern.permute.xlu0 0
    %514 = vperm.xlu0 %513, %v496
    %v515 = vpop.permute.xlu0 %514
    %518 = vset.pattern.permute.xlu0 0
    %519 = vperm.xlu0 %518, %v497
    %v520 = vpop.permute.xlu0 %519
    %v522 = vsel %vm50, %v515, %v509
    %v523 = vsel %vm50, %v520, %v511
    %v524 = vsub.f32 %v263, %v522
    %v525 = vsub.f32 %v264, %v523
    %v526 = vsub.f32 0.0, %v524
    %v527 = vsub.f32 0.0, %v525
    %v528 = vmul.f32 %v526, %v526
    %v529 = vmul.f32 %v527, %v527
    %v530 = vadd.f32 %v493, %v528
    %v531 = vadd.f32 %v494, %v529
    %s532 = scalar_lea.vmem [#allocation4], 160
    %v533 = vld [vmem:[%s532] sm:$0xff]
    %v534 = vld [vmem:[%s532 + $0x8] sm:$0xff]
    %537 = vrot.lane.b32.xlu0 %v267, 1
    %v538 = vpop.permute.xlu0 %537
    %539 = vrot.lane.b32.xlu0 %v268, 1
    %v540 = vpop.permute.xlu0 %539
    %543 = vst.msk [vmem:[%s532] sm:$0xff] %vm63, %v538
    %544 = vst.msk [vmem:[%s532 + $0x8] sm:$0xff] %vm63, %v540
    %545 = vrot.lane.b32.xlu0 %v267, 1
    %v546 = vpop.permute.xlu0 %545
    %547 = vrot.lane.b32.xlu0 %v268, 1
    %v548 = vpop.permute.xlu0 %547
    %550 = vset.pattern.permute.xlu0 0
    %551 = vperm.xlu0 %550, %v533
    %v552 = vpop.permute.xlu0 %551
    %555 = vset.pattern.permute.xlu0 0
    %556 = vperm.xlu0 %555, %v534
    %v557 = vpop.permute.xlu0 %556
    %v559 = vsel %vm50, %v552, %v546
    %v560 = vsel %vm50, %v557, %v548
    %v561 = vsub.f32 %v267, %v559
    %v562 = vsub.f32 %v268, %v560
    %v563 = vsub.f32 0.0, %v561
    %v564 = vsub.f32 0.0, %v562
    %v565 = vmul.f32 %v563, %v563
    %v566 = vmul.f32 %v564, %v564
    %v567 = vadd.f32 %v530, %v565
    %v568 = vadd.f32 %v531, %v566
    %s569 = scalar_lea.vmem [#allocation4], 176
    %v570 = vld [vmem:[%s569] sm:$0xff]
    %v571 = vld [vmem:[%s569 + $0x8] sm:$0xff]
    %574 = vrot.lane.b32.xlu0 %v273, 1
    %v575 = vpop.permute.xlu0 %574
    %576 = vrot.lane.b32.xlu0 %v274, 1
    %v577 = vpop.permute.xlu0 %576
    %580 = vst.msk [vmem:[%s569] sm:$0xff] %vm63, %v575
    %581 = vst.msk [vmem:[%s569 + $0x8] sm:$0xff] %vm63, %v577
    %582 = vrot.lane.b32.xlu0 %v273, 1
    %v583 = vpop.permute.xlu0 %582
    %584 = vrot.lane.b32.xlu0 %v274, 1
    %v585 = vpop.permute.xlu0 %584
    %587 = vset.pattern.permute.xlu0 0
    %588 = vperm.xlu0 %587, %v570
    %v589 = vpop.permute.xlu0 %588
    %592 = vset.pattern.permute.xlu0 0
    %593 = vperm.xlu0 %592, %v571
    %v594 = vpop.permute.xlu0 %593
    %v596 = vsel %vm50, %v589, %v583
    %v597 = vsel %vm50, %v594, %v585
    %v598 = vsub.f32 %v273, %v596
    %v599 = vsub.f32 %v274, %v597
    %v600 = vsub.f32 1.0, %v598
    %v601 = vsub.f32 1.0, %v599
    %v602 = vmul.f32 %v600, %v600
    %v603 = vmul.f32 %v601, %v601
    %v604 = vadd.f32 %v567, %v602
    %v605 = vadd.f32 %v568, %v603
    %v606 = vsel %vm164, %v604, 0.0
    %v607 = vsel %vm164, %v605, 0.0
    %v608 = vrsqrt.pop %v606
    %v609 = vmul.f32 %v606, %v608
    %vm610 = vcmp.eq.f32.partialorder %v606, inf
    %v611 = vsel %vm610, %v606, %v609
    %vm612 = vcmp.eq.f32.partialorder %v606, 0.0
    %v613 = vand.u32 %v606, 2147483648
    %v614 = vsel %vm612, %v613, %v611
    %v615 = vrsqrt.pop %v607
    %v616 = vmul.f32 %v607, %v615
    %vm617 = vcmp.eq.f32.partialorder %v607, inf
    %v618 = vsel %vm617, %v607, %v616
    %vm619 = vcmp.eq.f32.partialorder %v607, 0.0
    %v620 = vand.u32 %v607, 2147483648
    %v621 = vsel %vm619, %v620, %v618
    %v622 = vld [vmem:[#allocation3] sm:$0xff]
    %v623 = vld [vmem:[#allocation3 + $0x8] sm:$0xff]
    %624 = vadd.xlane.f32.xlu0 %v614
    %v625 = vpop.xlane.xlu0 %624
    %626 = vadd.xlane.f32.xlu0 %v621
    %v627 = vpop.xlane.xlu0 %626
    %v628 = vadd.f32 %v622, %v625
    %v629 = vadd.f32 %v623, %v627
    %630 = vst.msk [vmem:[#allocation3] sm:$0xff] %vm63, %v628
    %631 = vst.msk [vmem:[#allocation3 + $0x8] sm:$0xff] %vm63, %v629
    // Predicated region
    $region14: #{tpu_custom_call.1} parent=1 // pred_check
      %p632 = pneg %p12
    $region15: #{tpu_custom_call.1} parent=1 // pred_check_branch
      %634 = sbr.rel (%p632) target = $region17
    $region16: #{tpu_custom_call.1} parent=1 // pred_region
      %v635 = vld [vmem:[%s1] sm:$0xff]
      %v636 = vld [vmem:[%s1 + $0x8] sm:$0xff]
      %v637 = vld [vmem:[#allocation2] sm:$0xff]
      %v638 = vld [vmem:[#allocation2 + $0x8] sm:$0xff]
      %v639 = vmul.f32 %v637, %v635
      %v640 = vmul.f32 %v638, %v636
      %v641 = vsel %vm63, %v639, 0.0
      %v642 = vsel %vm63, %v640, 0.0
      %v643 = vadd.f32 %v641, %v642
      %644 = vadd.xlane.f32.xlu0 %v643
      %v645 = vpop.xlane.xlu0 %644
      %v646 = vrot.slane %v645, 4
      %v647 = vadd.f32 %v645, %v646
      %v648 = vrot.slane %v647, 2
      %v649 = vadd.f32 %v647, %v648
      %v650 = vrot.slane %v649, 1
      %v651 = vadd.f32 %v649, %v650
      %s652 = vtos %v651
      %v653 = vrcp.pop 112.0
      %s654 = vtos %v653
      %s655 = smul.f32 %s652, %s654
      %s656 = sadd.f32 %s655, 0.0
      %v657 = vld [vmem:[#allocation3] sm:$0xff]
      %v658 = vld [vmem:[#allocation3 + $0x8] sm:$0xff]
      %v659 = vmul.f32 %v657, %v635
      %v660 = vmul.f32 %v658, %v636
      %v661 = vsel %vm63, %v659, 0.0
      %v662 = vsel %vm63, %v660, 0.0
      %v663 = vadd.f32 %v661, %v662
      %664 = vadd.xlane.f32.xlu0 %v663
      %v665 = vpop.xlane.xlu0 %664
      %v666 = vrot.slane %v665, 4
      %v667 = vadd.f32 %v665, %v666
      %v668 = vrot.slane %v667, 2
      %v669 = vadd.f32 %v667, %v668
      %v670 = vrot.slane %v669, 1
      %v671 = vadd.f32 %v669, %v670
      %s672 = vtos %v671
      %v673 = vrcp.pop 112.0
      %s674 = vtos %v673
      %s675 = smul.f32 %s672, %s674
      %s676 = sadd.f32 %s656, %s675
      %s677 = scalar_lea.smem [#allocation5], 0
      %678 = sst [smem:[%s677]] %s676
    $region17: #{tpu_custom_call.1} parent=1 // pred_fallthru
      _
    // Predicated region
    $region18: #{tpu_custom_call.1} parent=1 // pred_check
      _
    $region19: #{tpu_custom_call.1} parent=1 // pred_check_branch
      %680 = sbr.rel (0) target = $region21
    $region20: #{tpu_custom_call.1} parent=1 // pred_region
      %s682 = ssub.s32 16, 16
      %683 = vsyncadd [#allocation6], %s682
      %686 = dma.smem_to_hbm [#allocation5], 16, %s2, [#allocation6]
    $region21: #{tpu_custom_call.1} parent=1 // pred_fallthru
      _
    // Predicated region
    $region22: #{tpu_custom_call.1} parent=1 // pred_check
      _
    $region23: #{tpu_custom_call.1} parent=1 // pred_check_branch
      %688 = sbr.rel (0) target = $region25
    $region24: #{tpu_custom_call.1} parent=1 // pred_region
      %689 = dma.done [#allocation6], 16
    $region25: #{tpu_custom_call.1} parent=1 // pred_fallthru
      _
    %690 = sfence
    %691 = vsyncpa [#allocation6], 1

</llo_original>
